<compile_context>
chip_gen: v7x
topology: tpu7x:2x2x1
jax: 0.10.0
libtpu: 0.0.40
codegen_flags: <defaults>
</compile_context>

<pallas_src>
import functools

import jax
import jax.numpy as jnp
from jax.experimental import pallas as pl
from jax.experimental.pallas import tpu as pltpu

INPUT_DIM = 384
HIDDEN_DIM = 256


def autoencoder_kernel(x_ref, w1_ref, b1_ref, w2_ref, b2_ref, o_ref,
                       *, compute_dtype):
    # x_ref:  (tb, D)  input dtype (f32)   w1_ref: (D, H) compute dtype
    # b1_ref: (1, H)   f32                 w2_ref: (H, D) compute dtype
    # b2_ref: (1, D)   f32                 o_ref:  (tb, D) output dtype
    #
    # Downcast x in-register (no extra HBM traffic), MXU matmuls with f32
    # accumulation, bias/ReLU/tanh in f32 (v5e VPU/EUP have no bf16), single
    # cast on store.
    x = x_ref[...].astype(compute_dtype)

    # Encoder: Linear + ReLU.
    h = jnp.dot(x, w1_ref[...], preferred_element_type=jnp.float32)
    h = jnp.maximum(h + b1_ref[...], 0.0)

    # Decoder: Linear + Tanh.
    d = jnp.dot(h.astype(compute_dtype), w2_ref[...],
                preferred_element_type=jnp.float32)
    o_ref[...] = jnp.tanh(d + b2_ref[...]).astype(o_ref.dtype)


def _round_up(n, m):
    return ((n + m - 1) // m) * m


def _choose_tile_b(batch, *, max_tile=2048, align=16):
    """Aligned batch tile: big enough to amortize per-step overhead and run
    long unmasked stores, capped for v7x's 64 MiB VMEM, and forcing >= 2 grid
    steps whenever the batch allows it (dual-TC megacore sharding)."""
    if batch <= align:
        return align
    half = _round_up(pl.cdiv(batch, 2), align)
    return min(max_tile, half)


def autoencoder_forward(x, w1, b1, w2, b2, *, tile_b=None,
                        compute_dtype=jnp.bfloat16, out_dtype=None):
    B, D = x.shape
    H = w1.shape[1]
    assert w1.shape == (D, H)
    assert w2.shape == (H, D)
    # Default keeps strict dtype parity with the input (f32 in the demo).
    # Passing out_dtype=jnp.bfloat16 halves the output HBM traffic (~2/3 of
    # per-row bytes when f32) at ~4e-3 abs error since tanh is bounded.
    out_dtype = x.dtype if out_dtype is None else out_dtype

    # 16-row alignment is safe for every dtype in play (f32 needs 8, bf16 16).
    align = 16
    if tile_b is None:
        tile_b = _choose_tile_b(B, max_tile=2048, align=align)
    assert tile_b % align == 0

    # Ragged last block: OOB reads are row-local and only feed discarded OOB
    # output rows; OOB writes are dropped.  No padding, no trailing slice.
    grid_b = pl.cdiv(B, tile_b)

    # Weights are tiny (~200 KiB bf16 total) and resident across the grid, so
    # the one-off wrapper cast is negligible.  Biases stay f32.
    w1_c = w1.astype(compute_dtype)
    w2_c = w2.astype(compute_dtype)
    b1_f = jnp.reshape(b1, (1, H)).astype(jnp.float32)
    b2_f = jnp.reshape(b2, (1, D)).astype(jnp.float32)

    nbytes = lambda a: a.size * jnp.dtype(a.dtype).itemsize
    cost = pl.CostEstimate(
        flops=4 * B * D * H,                 # 2 matmuls, 2*M*N*K each
        transcendentals=B * D,               # tanh
        bytes_accessed=(B * D * jnp.dtype(x.dtype).itemsize
                        + B * D * jnp.dtype(out_dtype).itemsize
                        + nbytes(w1_c) + nbytes(w2_c)
                        + nbytes(b1_f) + nbytes(b2_f)),
    )

    kernel = functools.partial(autoencoder_kernel, compute_dtype=compute_dtype)

    return pl.pallas_call(
        kernel,
        out_shape=jax.ShapeDtypeStruct((B, D), out_dtype),
        grid_spec=pltpu.PrefetchScalarGridSpec(
            num_scalar_prefetch=0,
            grid=(grid_b,),
            in_specs=[
                # Streaming x tile, default double-buffered pipeline.
                pl.BlockSpec((tile_b, D), lambda i: (i, 0)),
                # Constant operands: resident across the grid.
                pl.BlockSpec((D, H), lambda i: (0, 0)),   # w1
                pl.BlockSpec((1, H), lambda i: (0, 0)),   # b1 (f32)
                pl.BlockSpec((H, D), lambda i: (0, 0)),   # w2
                pl.BlockSpec((1, D), lambda i: (0, 0)),   # b2 (f32)
            ],
            out_specs=pl.BlockSpec((tile_b, D), lambda i: (i, 0)),
        ),
        compiler_params=pltpu.CompilerParams(
            dimension_semantics=("parallel",),
            # tile_b<=2048: ~<20 MiB peak incl. double buffers & f32 temps;
            # 48 MiB leaves headroom below v7x's 64 MiB physical VMEM.
            vmem_limit_bytes=48 * 1024 * 1024,
        ),
        cost_estimate=cost,
    )(x, w1_c, b1_f, w2_c, b2_f)


def init_params(key, input_dim=INPUT_DIM, hidden_dim=HIDDEN_DIM, dtype=jnp.float32):
    # PyTorch-style uniform init, stored as (in_features, out_features) so the
    # kernel computes x @ W + b without transposes.
    k1, k2, k3, k4 = jax.random.split(key, 4)
    bound1 = 1.0 / (input_dim ** 0.5)
    bound2 = 1.0 / (hidden_dim ** 0.5)
    w1 = jax.random.uniform(k1, (input_dim, hidden_dim), dtype, -bound1, bound1)
    b1 = jax.random.uniform(k2, (1, hidden_dim), dtype, -bound1, bound1)
    w2 = jax.random.uniform(k3, (hidden_dim, input_dim), dtype, -bound2, bound2)
    b2 = jax.random.uniform(k4, (1, input_dim), dtype, -bound2, bound2)
    return w1, b1, w2, b2


def reference_forward(x, w1, b1, w2, b2):
    h = jnp.maximum(x @ w1 + b1, 0.0)
    return jnp.tanh(h @ w2 + b2)


if __name__ == "__main__":
    key = jax.random.PRNGKey(0)
    kx, kx2, kp = jax.random.split(key, 3)
    w1, b1, w2, b2 = init_params(kp)

    fwd = jax.jit(autoencoder_forward)

    # Case 1: small batch (single ragged block), f32 parity output.
    batch = 8
    x = jax.random.normal(kx, (batch, INPUT_DIM), dtype=jnp.float32)
    out = jax.block_until_ready(fwd(x, w1, b1, w2, b2))
    ref = reference_forward(x, w1, b1, w2, b2)
    assert out.shape == (batch, INPUT_DIM)
    assert out.dtype == x.dtype
    # bf16 MXU streaming with f32 accumulation: loose tolerance vs f32 ref.
    err = float(jnp.max(jnp.abs(out.astype(jnp.float32) - ref)))
    assert err < 3e-2, f"max abs error {err}"

    # Case 2: non-tile-aligned batch -> multi-step grid with a ragged tail.
    batch2 = 100
    x2 = jax.random.normal(kx2, (batch2, INPUT_DIM), dtype=jnp.float32)
    out2 = jax.block_until_ready(fwd(x2, w1, b1, w2, b2))
    ref2 = reference_forward(x2, w1, b1, w2, b2)
    assert out2.shape == (batch2, INPUT_DIM)
    err2 = float(jnp.max(jnp.abs(out2.astype(jnp.float32) - ref2)))
    assert err2 < 3e-2, f"max abs error {err2}"

    # Case 3: bandwidth-optimized bf16 output (tanh is bounded in [-1, 1]).
    out3 = jax.block_until_ready(
        jax.jit(functools.partial(autoencoder_forward, out_dtype=jnp.bfloat16))(
            x2, w1, b1, w2, b2))
    assert out3.dtype == jnp.bfloat16
    err3 = float(jnp.max(jnp.abs(out3.astype(jnp.float32) - ref2)))
    assert err3 < 5e-2, f"max abs error {err3}"

    print("KERNEL_OK")
</pallas_src>

<mosaic_0001>
module attributes {stable_mosaic.version = 11 : i64} {
  func.func @autoencoder_kernel(%arg0: i32, %arg1: memref<16x384xf32, #tpu.memory_space<vmem>>, %arg2: memref<384x256xbf16, #tpu.memory_space<vmem>>, %arg3: memref<1x256xf32, #tpu.memory_space<vmem>>, %arg4: memref<256x384xbf16, #tpu.memory_space<vmem>>, %arg5: memref<1x384xf32, #tpu.memory_space<vmem>>, %arg6: memref<16x384xf32, #tpu.memory_space<vmem>>) attributes {dimension_semantics = [#tpu.dimension_semantics<parallel>], iteration_bounds = array<i64: 1>, scalar_prefetch = 0 : i64, scratch_operands = 0 : i64, tpu.core_type = #tpu.core_type<tc>, window_params = [{transform_indices = @transform_0, window_bounds = array<i64: 16, 384>}, {pipeline_mode = #tpu.pipeline_mode<synchronous>, transform_indices = @transform_1, window_bounds = array<i64: 384, 256>}, {pipeline_mode = #tpu.pipeline_mode<synchronous>, transform_indices = @transform_2, window_bounds = array<i64: 1, 256>}, {pipeline_mode = #tpu.pipeline_mode<synchronous>, transform_indices = @transform_3, window_bounds = array<i64: 256, 384>}, {pipeline_mode = #tpu.pipeline_mode<synchronous>, transform_indices = @transform_4, window_bounds = array<i64: 1, 384>}, {transform_indices = @transform_5, window_bounds = array<i64: 16, 384>}]} {
    %c0 = arith.constant 0 : index
    %c0_0 = arith.constant 0 : index
    %0 = vector.load %arg1[%c0, %c0_0] : memref<16x384xf32, #tpu.memory_space<vmem>>, vector<16x384xf32>
    %1 = arith.truncf %0 : vector<16x384xf32> to vector<16x384xbf16>
    %c0_1 = arith.constant 0 : index
    %c0_2 = arith.constant 0 : index
    %2 = vector.load %arg2[%c0_1, %c0_2] : memref<384x256xbf16, #tpu.memory_space<vmem>>, vector<384x256xbf16>
    %cst = arith.constant dense<0.000000e+00> : vector<16x256xf32>
    %3 = tpu.matmul %1, %2, %cst {dimension_numbers = #tpu.dot_dimension_numbers<[1], [0], [0], [1], [0, 0, 1, 1], [], []>} : vector<16x384xbf16>, vector<384x256xbf16>, vector<16x256xf32> -> vector<16x256xf32>
    %c0_3 = arith.constant 0 : index
    %c0_4 = arith.constant 0 : index
    %4 = vector.load %arg3[%c0_3, %c0_4] : memref<1x256xf32, #tpu.memory_space<vmem>>, vector<1x256xf32>
    %5 = vector.broadcast %4 : vector<1x256xf32> to vector<16x256xf32>
    %6 = arith.addf %3, %5 : vector<16x256xf32>
    %cst_5 = arith.constant 0.000000e+00 : f32
    %7 = vector.broadcast %cst_5 : f32 to vector<16x256xf32>
    %8 = arith.maximumf %6, %7 : vector<16x256xf32>
    %9 = arith.truncf %8 : vector<16x256xf32> to vector<16x256xbf16>
    %c0_6 = arith.constant 0 : index
    %c0_7 = arith.constant 0 : index
    %10 = vector.load %arg4[%c0_6, %c0_7] : memref<256x384xbf16, #tpu.memory_space<vmem>>, vector<256x384xbf16>
    %cst_8 = arith.constant dense<0.000000e+00> : vector<16x384xf32>
    %11 = tpu.matmul %9, %10, %cst_8 {dimension_numbers = #tpu.dot_dimension_numbers<[1], [0], [0], [1], [0, 0, 1, 1], [], []>} : vector<16x256xbf16>, vector<256x384xbf16>, vector<16x384xf32> -> vector<16x384xf32>
    %c0_9 = arith.constant 0 : index
    %c0_10 = arith.constant 0 : index
    %12 = vector.load %arg5[%c0_9, %c0_10] : memref<1x384xf32, #tpu.memory_space<vmem>>, vector<1x384xf32>
    %13 = vector.broadcast %12 : vector<1x384xf32> to vector<16x384xf32>
    %14 = arith.addf %11, %13 : vector<16x384xf32>
    %15 = math.tanh %14 : vector<16x384xf32>
    %c0_11 = arith.constant 0 : index
    %c0_12 = arith.constant 0 : index
    %16 = vector.load %arg6[%c0_11, %c0_12] : memref<16x384xf32, #tpu.memory_space<vmem>>, vector<16x384xf32>
    tpu.vector_store %arg6[%c0_11, %c0_12], %15 {strides = array<i32>} : memref<16x384xf32, #tpu.memory_space<vmem>>, vector<16x384xf32>,
    return
  }
  func.func @transform_0(%arg0: i32) -> (i32, i32) {
    %c0_i32 = arith.constant 0 : i32
    %c0_i32_0 = arith.constant 0 : i32
    return %arg0, %c0_i32 : i32, i32
  }
  func.func @transform_1(%arg0: i32) -> (i32, i32) {
    %c0_i32 = arith.constant 0 : i32
    %c0_i32_0 = arith.constant 0 : i32
    %c0_i32_1 = arith.constant 0 : i32
    return %c0_i32, %c0_i32_0 : i32, i32
  }
  func.func @transform_2(%arg0: i32) -> (i32, i32) {
    %c0_i32 = arith.constant 0 : i32
    %c0_i32_0 = arith.constant 0 : i32
    %c0_i32_1 = arith.constant 0 : i32
    return %c0_i32, %c0_i32_0 : i32, i32
  }
  func.func @transform_3(%arg0: i32) -> (i32, i32) {
    %c0_i32 = arith.constant 0 : i32
    %c0_i32_0 = arith.constant 0 : i32
    %c0_i32_1 = arith.constant 0 : i32
    return %c0_i32, %c0_i32_0 : i32, i32
  }
  func.func @transform_4(%arg0: i32) -> (i32, i32) {
    %c0_i32 = arith.constant 0 : i32
    %c0_i32_0 = arith.constant 0 : i32
    %c0_i32_1 = arith.constant 0 : i32
    return %c0_i32, %c0_i32_0 : i32, i32
  }
  func.func @transform_5(%arg0: i32) -> (i32, i32) {
    %c0_i32 = arith.constant 0 : i32
    %c0_i32_0 = arith.constant 0 : i32
    return %arg0, %c0_i32 : i32, i32
  }
}

</mosaic_0001>

<llo_original>
// kernel: autoencoder_forward.1
$region0: #{autoencoder_forward.1}
  #allocation0 [shape = 'u32[]', space=smem, size = 0x4, offset = 0x4, fixed_abs, tag = 'smem constant byte address 0x4 - core index']
  #allocation1 [shape = 'u32[144,128]{1,0:T(1,128)}', space=vmem, size = 0x12000, scoped, tag = 'internal scratch']
  %s0 = inlined_call_operand.vmem [shape: f32[8,384], index: 0, kind: input, shape index: {}]
  %s1 = inlined_call_operand.vmem [shape: bf16[384,256], index: 1, kind: input, shape index: {}]
  %s2 = inlined_call_operand.vmem [shape: f32[1,256], index: 2, kind: input, shape index: {}]
  %s3 = inlined_call_operand.vmem [shape: bf16[256,384], index: 3, kind: input, shape index: {}]
  %s4 = inlined_call_operand.vmem [shape: f32[1,384], index: 4, kind: input, shape index: {}]
  %s5 = inlined_call_operand.hbm [shape: f32[8,384], index: 5, kind: output, shape index: {}]
  %s6 = sld [smem:[#allocation0]]
  $region30: #{autoencoder_forward.1} parent=0
    _
  %s8 = ssub.s32 1, %s6
  %s9 = scalar_select 0, %s8, %s6
  $region1: #{autoencoder_forward.1} parent=0
    #allocation2 [shape = 'u8[24576]{0}', space=vmem, size = 0x6000, scoped, tag = 'output window, operand 0, single buffered']
    #allocation3 [shape = 's32[1]{0}', space=sflag, size = 0x4, scoped, tag = 'scoped memory for autoencoder_forward.1']
    %10 = vsyncpa [#allocation3], 0
    // Predicated region
    $region2: #{autoencoder_forward.1} parent=1 // pred_check
      _
    $region3: #{autoencoder_forward.1} parent=1 // pred_check_branch
      %12 = sbr.rel (0) target = $region5
    $region4: #{autoencoder_forward.1} parent=1 // pred_region
      _
    $region5: #{autoencoder_forward.1} parent=1 // pred_fallthru
      _
    // Predicated region
    $region6: #{autoencoder_forward.1} parent=1 // pred_check
      _
    $region7: #{autoencoder_forward.1} parent=1 // pred_check_branch
      %14 = sbr.rel (0) target = $region9
    $region8: #{autoencoder_forward.1} parent=1 // pred_region
      _
    $region9: #{autoencoder_forward.1} parent=1 // pred_fallthru
      _
    // Predicated region
    $region10: #{autoencoder_forward.1} parent=1 // pred_check
      _
    $region11: #{autoencoder_forward.1} parent=1 // pred_check_branch
      %16 = sbr.rel (0) target = $region13
    $region12: #{autoencoder_forward.1} parent=1 // pred_region
      _
    $region13: #{autoencoder_forward.1} parent=1 // pred_fallthru
      _
    // Predicated region
    $region14: #{autoencoder_forward.1} parent=1 // pred_check
      _
    $region15: #{autoencoder_forward.1} parent=1 // pred_check_branch
      %18 = sbr.rel (0) target = $region17
    $region16: #{autoencoder_forward.1} parent=1 // pred_region
      _
    $region17: #{autoencoder_forward.1} parent=1 // pred_fallthru
      _
    // Predicated region
    $region18: #{autoencoder_forward.1} parent=1 // pred_check
      _
    $region19: #{autoencoder_forward.1} parent=1 // pred_check_branch
      %20 = sbr.rel (0) target = $region21
    $region20: #{autoencoder_forward.1} parent=1 // pred_region
      _
    $region21: #{autoencoder_forward.1} parent=1 // pred_fallthru
      _
    %v22 = vld [vmem:[%s0] sm:$0xff]
    %v23 = vld [vmem:[%s0 + $0x8] sm:$0xff]
    %v24 = vld [vmem:[%s0 + $0x10] sm:$0xff]
    %v25 = vld [vmem:[%s0 + $0x18] sm:$0xff]
    %v26 = vld [vmem:[%s0 + $0x20] sm:$0xff]
    %v27 = vld [vmem:[%s0 + $0x28] sm:$0xff]
    %v28 = vpack.c.bf16 %v25, %v22
    %v29 = vpack.c.bf16 %v26, %v23
    %v30 = vpack.c.bf16 %v27, %v24
    %v31 = vld [vmem:[%s1] sm:$0xff]
    %v32 = vld [vmem:[%s1 + $0x8] sm:$0xff]
    %v33 = vld [vmem:[%s1 + $0x10] sm:$0xff]
    %v34 = vld [vmem:[%s1 + $0x18] sm:$0xff]
    %v35 = vld [vmem:[%s1 + $0x20] sm:$0xff]
    %v36 = vld [vmem:[%s1 + $0x28] sm:$0xff]
    %v37 = vld [vmem:[%s1 + $0x30] sm:$0xff]
    %v38 = vld [vmem:[%s1 + $0x38] sm:$0xff]
    %v39 = vld [vmem:[%s1 + $0x40] sm:$0xff]
    %v40 = vld [vmem:[%s1 + $0x48] sm:$0xff]
    %v41 = vld [vmem:[%s1 + $0x50] sm:$0xff]
    %v42 = vld [vmem:[%s1 + $0x58] sm:$0xff]
    %v43 = vld [vmem:[%s1 + $0x60] sm:$0xff]
    %v44 = vld [vmem:[%s1 + $0x68] sm:$0xff]
    %v45 = vld [vmem:[%s1 + $0x70] sm:$0xff]
    %v46 = vld [vmem:[%s1 + $0x78] sm:$0xff]
    %v47 = vld [vmem:[%s1 + $0x80] sm:$0xff]
    %v48 = vld [vmem:[%s1 + $0x88] sm:$0xff]
    %v49 = vld [vmem:[%s1 + $0x90] sm:$0xff]
    %v50 = vld [vmem:[%s1 + $0x98] sm:$0xff]
    %v51 = vld [vmem:[%s1 + $0xa0] sm:$0xff]
    %v52 = vld [vmem:[%s1 + $0xa8] sm:$0xff]
    %v53 = vld [vmem:[%s1 + $0xb0] sm:$0xff]
    %v54 = vld [vmem:[%s1 + $0xb8] sm:$0xff]
    %v55 = vld [vmem:[%s1 + $0xc0] sm:$0xff]
    %v56 = vld [vmem:[%s1 + $0xc8] sm:$0xff]
    %v57 = vld [vmem:[%s1 + $0xd0] sm:$0xff]
    %v58 = vld [vmem:[%s1 + $0xd8] sm:$0xff]
    %v59 = vld [vmem:[%s1 + $0xe0] sm:$0xff]
    %v60 = vld [vmem:[%s1 + $0xe8] sm:$0xff]
    %v61 = vld [vmem:[%s1 + $0xf0] sm:$0xff]
    %v62 = vld [vmem:[%s1 + $0xf8] sm:$0xff]
    %v63 = vld [vmem:[%s1 + $0x100] sm:$0xff]
    %v64 = vld [vmem:[%s1 + $0x108] sm:$0xff]
    %v65 = vld [vmem:[%s1 + $0x110] sm:$0xff]
    %v66 = vld [vmem:[%s1 + $0x118] sm:$0xff]
    %v67 = vld [vmem:[%s1 + $0x120] sm:$0xff]
    %v68 = vld [vmem:[%s1 + $0x128] sm:$0xff]
    %v69 = vld [vmem:[%s1 + $0x130] sm:$0xff]
    %v70 = vld [vmem:[%s1 + $0x138] sm:$0xff]
    %v71 = vld [vmem:[%s1 + $0x140] sm:$0xff]
    %v72 = vld [vmem:[%s1 + $0x148] sm:$0xff]
    %v73 = vld [vmem:[%s1 + $0x150] sm:$0xff]
    %v74 = vld [vmem:[%s1 + $0x158] sm:$0xff]
    %v75 = vld [vmem:[%s1 + $0x160] sm:$0xff]
    %v76 = vld [vmem:[%s1 + $0x168] sm:$0xff]
    %v77 = vld [vmem:[%s1 + $0x170] sm:$0xff]
    %v78 = vld [vmem:[%s1 + $0x178] sm:$0xff]
    %v79 = vld [vmem:[%s2] sm:$0x3]
    %v81 = vlaneseq
    %v82 = vshrl.u32 %v81, 7
    %v83 = vsub.s32 0, %v82
    %v84 = vrot.slane %v79, %v83
    %v85 = vlaneseq
    %v86 = vshrl.u32 %v85, 7
    %v87 = vsub.s32 1, %v86
    %v88 = vrot.slane %v79, %v87
    %v139 = vunpack.c.l.b16 %v31
    %v140 = vunpack.c.h.b16 %v31
    %v141 = vunpack.c.l.b16 %v32
    %v142 = vunpack.c.h.b16 %v32
    %v143 = vunpack.c.l.b16 %v33
    %v144 = vunpack.c.h.b16 %v33
    %v145 = vunpack.c.l.b16 %v34
    %v146 = vunpack.c.h.b16 %v34
    %v147 = vunpack.c.l.b16 %v35
    %v148 = vunpack.c.h.b16 %v35
    %v149 = vunpack.c.l.b16 %v36
    %v150 = vunpack.c.h.b16 %v36
    %v151 = vunpack.c.l.b16 %v37
    %v152 = vunpack.c.h.b16 %v37
    %v153 = vunpack.c.l.b16 %v38
    %v154 = vunpack.c.h.b16 %v38
    %v155 = vunpack.c.l.b16 %v39
    %v156 = vunpack.c.h.b16 %v39
    %v157 = vunpack.c.l.b16 %v40
    %v158 = vunpack.c.h.b16 %v40
    %v159 = vunpack.c.l.b16 %v41
    %v160 = vunpack.c.h.b16 %v41
    %v161 = vunpack.c.l.b16 %v42
    %v162 = vunpack.c.h.b16 %v42
    %v163 = vunpack.c.l.b16 %v43
    %v164 = vunpack.c.h.b16 %v43
    %v165 = vunpack.c.l.b16 %v44
    %v166 = vunpack.c.h.b16 %v44
    %v167 = vunpack.c.l.b16 %v45
    %v168 = vunpack.c.h.b16 %v45
    %v169 = vunpack.c.l.b16 %v46
    %v170 = vunpack.c.h.b16 %v46
    %v171 = vunpack.c.l.b16 %v47
    %v172 = vunpack.c.h.b16 %v47
    %v173 = vunpack.c.l.b16 %v48
    %v174 = vunpack.c.h.b16 %v48
    %v175 = vunpack.c.l.b16 %v49
    %v176 = vunpack.c.h.b16 %v49
    %v177 = vunpack.c.l.b16 %v50
    %v178 = vunpack.c.h.b16 %v50
    %v179 = vunpack.c.l.b16 %v51
    %v180 = vunpack.c.h.b16 %v51
    %v181 = vunpack.c.l.b16 %v52
    %v182 = vunpack.c.h.b16 %v52
    %v183 = vunpack.c.l.b16 %v53
    %v184 = vunpack.c.h.b16 %v53
    %v185 = vunpack.c.l.b16 %v54
    %v186 = vunpack.c.h.b16 %v54
    %v187 = vunpack.c.l.b16 %v55
    %v188 = vunpack.c.h.b16 %v55
    %v189 = vunpack.c.l.b16 %v56
    %v190 = vunpack.c.h.b16 %v56
    %v191 = vunpack.c.l.b16 %v57
    %v192 = vunpack.c.h.b16 %v57
    %v193 = vunpack.c.l.b16 %v58
    %v194 = vunpack.c.h.b16 %v58
    %v195 = vunpack.c.l.b16 %v59
    %v196 = vunpack.c.h.b16 %v59
    %v197 = vunpack.c.l.b16 %v60
    %v198 = vunpack.c.h.b16 %v60
    %v199 = vunpack.c.l.b16 %v61
    %v200 = vunpack.c.h.b16 %v61
    %v201 = vunpack.c.l.b16 %v62
    %v202 = vunpack.c.h.b16 %v62
    %v203 = vunpack.c.l.b16 %v63
    %v204 = vunpack.c.h.b16 %v63
    %v205 = vunpack.c.l.b16 %v64
    %v206 = vunpack.c.h.b16 %v64
    %v207 = vunpack.c.l.b16 %v65
    %v208 = vunpack.c.h.b16 %v65
    %v209 = vunpack.c.l.b16 %v66
    %v210 = vunpack.c.h.b16 %v66
    %v211 = vunpack.c.l.b16 %v67
    %v212 = vunpack.c.h.b16 %v67
    %v213 = vunpack.c.l.b16 %v68
    %v214 = vunpack.c.h.b16 %v68
    %v215 = vunpack.c.l.b16 %v69
    %v216 = vunpack.c.h.b16 %v69
    %v217 = vunpack.c.l.b16 %v70
    %v218 = vunpack.c.h.b16 %v70
    %v219 = vunpack.c.l.b16 %v71
    %v220 = vunpack.c.h.b16 %v71
    %v221 = vunpack.c.l.b16 %v72
    %v222 = vunpack.c.h.b16 %v72
    %v223 = vunpack.c.l.b16 %v73
    %v224 = vunpack.c.h.b16 %v73
    %v225 = vunpack.c.l.b16 %v74
    %v226 = vunpack.c.h.b16 %v74
    %v227 = vunpack.c.l.b16 %v75
    %v228 = vunpack.c.h.b16 %v75
    %v229 = vunpack.c.l.b16 %v76
    %v230 = vunpack.c.h.b16 %v76
    %v231 = vunpack.c.l.b16 %v77
    %v232 = vunpack.c.h.b16 %v77
    %v233 = vunpack.c.l.b16 %v78
    %v234 = vunpack.c.h.b16 %v78
    %v235 = vpack.c.b16 %v141, %v139
    %v236 = vpack.c.b16 %v142, %v140
    %v237 = vpack.c.b16 %v145, %v143
    %v238 = vpack.c.b16 %v146, %v144
    %v239 = vpack.c.b16 %v149, %v147
    %v240 = vpack.c.b16 %v150, %v148
    %v241 = vpack.c.b16 %v153, %v151
    %v242 = vpack.c.b16 %v154, %v152
    %v243 = vpack.c.b16 %v157, %v155
    %v244 = vpack.c.b16 %v158, %v156
    %v245 = vpack.c.b16 %v161, %v159
    %v246 = vpack.c.b16 %v162, %v160
    %v247 = vpack.c.b16 %v165, %v163
    %v248 = vpack.c.b16 %v166, %v164
    %v249 = vpack.c.b16 %v169, %v167
    %v250 = vpack.c.b16 %v170, %v168
    %v251 = vpack.c.b16 %v173, %v171
    %v252 = vpack.c.b16 %v174, %v172
    %v253 = vpack.c.b16 %v177, %v175
    %v254 = vpack.c.b16 %v178, %v176
    %v255 = vpack.c.b16 %v181, %v179
    %v256 = vpack.c.b16 %v182, %v180
    %v257 = vpack.c.b16 %v185, %v183
    %v258 = vpack.c.b16 %v186, %v184
    %v259 = vpack.c.b16 %v189, %v187
    %v260 = vpack.c.b16 %v190, %v188
    %v261 = vpack.c.b16 %v193, %v191
    %v262 = vpack.c.b16 %v194, %v192
    %v263 = vpack.c.b16 %v197, %v195
    %v264 = vpack.c.b16 %v198, %v196
    %v265 = vpack.c.b16 %v201, %v199
    %v266 = vpack.c.b16 %v202, %v200
    %v267 = vpack.c.b16 %v205, %v203
    %v268 = vpack.c.b16 %v206, %v204
    %v269 = vpack.c.b16 %v209, %v207
    %v270 = vpack.c.b16 %v210, %v208
    %v271 = vpack.c.b16 %v213, %v211
    %v272 = vpack.c.b16 %v214, %v212
    %v273 = vpack.c.b16 %v217, %v215
    %v274 = vpack.c.b16 %v218, %v216
    %v275 = vpack.c.b16 %v221, %v219
    %v276 = vpack.c.b16 %v222, %v220
    %v277 = vpack.c.b16 %v225, %v223
    %v278 = vpack.c.b16 %v226, %v224
    %v279 = vpack.c.b16 %v229, %v227
    %v280 = vpack.c.b16 %v230, %v228
    %v281 = vpack.c.b16 %v233, %v231
    %v282 = vpack.c.b16 %v234, %v232
    %331 = vmatprep.subr.bf16.mxu0 %v236
    %332 = vmatpush1.bf16.msra.mxu0 %v235
    %333 = vmatprep.subr.bf16.mxu0 %v238
    %334 = vmatpush1.bf16.msra.mxu0 %v237
    %335 = vmatprep.subr.bf16.mxu0 %v240
    %336 = vmatpush1.bf16.msra.mxu0 %v239
    %337 = vmatprep.subr.bf16.mxu0 %v242
    %338 = vmatpush1.bf16.msra.mxu0 %v241
    %339 = vmatprep.subr.bf16.mxu0 %v244
    %340 = vmatpush1.bf16.msra.mxu0 %v243
    %341 = vmatprep.subr.bf16.mxu0 %v246
    %342 = vmatpush1.bf16.msra.mxu0 %v245
    %343 = vmatprep.subr.bf16.mxu0 %v248
    %344 = vmatpush1.bf16.msra.mxu0 %v247
    %345 = vmatprep.subr.bf16.mxu0 %v250
    %346 = vmatpush1.bf16.msra.mxu0 %v249
    %347 = vmatprep.subr.bf16.mxu0 %v252
    %348 = vmatpush1.bf16.msra.mxu0 %v251
    %349 = vmatprep.subr.bf16.mxu0 %v254
    %350 = vmatpush1.bf16.msra.mxu0 %v253
    %351 = vmatprep.subr.bf16.mxu0 %v256
    %352 = vmatpush1.bf16.msra.mxu0 %v255
    %353 = vmatprep.subr.bf16.mxu0 %v258
    %354 = vmatpush1.bf16.msra.mxu0 %v257
    %355 = vmatprep.subr.bf16.mxu0 %v260
    %356 = vmatpush1.bf16.msra.mxu0 %v259
    %357 = vmatprep.subr.bf16.mxu0 %v262
    %358 = vmatpush1.bf16.msra.mxu0 %v261
    %359 = vmatprep.subr.bf16.mxu0 %v264
    %360 = vmatpush1.bf16.msra.mxu0 %v263
    %361 = vmatprep.subr.bf16.mxu0 %v266
    %362 = vmatpush1.bf16.msra.mxu0 %v265
    %363 = vmatprep.mubr.bf16.mxu0 %v29
    %364 = vmatmul.mubr.bf16.gmra.mrb[0].mxu0 %v28
    %v365 = vpop.f32.mrb[0].mxu0
    %v366 = vadd.f32 %v84, %v365
    %v367 = vpop.f32.mrb[0].mxu0
    %v368 = vadd.f32 %v88, %v367
    %v369 = vpop.f32.mrb[0].mxu0
    %v370 = vadd.f32 %v84, %v369
    %v371 = vpop.f32.mrb[0].mxu0
    %v372 = vadd.f32 %v88, %v371
    %373 = vdwg.mxu0
    %374 = vmatprep.subr.bf16.mxu0 %v268
    %375 = vmatpush1.bf16.msra.mxu0 %v267
    %376 = vmatprep.subr.bf16.mxu0 %v270
    %377 = vmatpush1.bf16.msra.mxu0 %v269
    %378 = vmatprep.subr.bf16.mxu0 %v272
    %379 = vmatpush1.bf16.msra.mxu0 %v271
    %380 = vmatprep.subr.bf16.mxu0 %v274
    %381 = vmatpush1.bf16.msra.mxu0 %v273
    %382 = vmatprep.subr.bf16.mxu0 %v276
    %383 = vmatpush1.bf16.msra.mxu0 %v275
    %384 = vmatprep.subr.bf16.mxu0 %v278
    %385 = vmatpush1.bf16.msra.mxu0 %v277
    %386 = vmatprep.subr.bf16.mxu0 %v280
    %387 = vmatpush1.bf16.msra.mxu0 %v279
    %388 = vmatprep.subr.bf16.mxu0 %v282
    %389 = vmatpush1.bf16.msra.mxu0 %v281
    %390 = vmatprep.subr.bf16.mxu0 0
    %391 = vmatpush1.bf16.msra.mxu0 0
    %392 = vmatprep.subr.bf16.mxu0 0
    %393 = vmatpush1.bf16.msra.mxu0 0
    %394 = vmatprep.subr.bf16.mxu0 0
    %395 = vmatpush1.bf16.msra.mxu0 0
    %396 = vmatprep.subr.bf16.mxu0 0
    %397 = vmatpush1.bf16.msra.mxu0 0
    %398 = vmatprep.subr.bf16.mxu0 0
    %399 = vmatpush1.bf16.msra.mxu0 0
    %400 = vmatprep.subr.bf16.mxu0 0
    %401 = vmatpush1.bf16.msra.mxu0 0
    %402 = vmatprep.subr.bf16.mxu0 0
    %403 = vmatpush1.bf16.msra.mxu0 0
    %404 = vmatprep.subr.bf16.mxu0 0
    %405 = vmatpush1.bf16.msra.mxu0 0
    %406 = vmatprep.mubr.bf16.mxu0 0
    %407 = vmatmul.mubr.bf16.gmra.mrb[0].mxu0 %v30
    %v408 = vpop.f32.mrb[0].mxu0
    %v409 = vadd.f32 %v366, %v408
    %v410 = vpop.f32.mrb[0].mxu0
    %v411 = vadd.f32 %v368, %v410
    %v412 = vpop.f32.mrb[0].mxu0
    %v413 = vadd.f32 %v370, %v412
    %v414 = vpop.f32.mrb[0].mxu0
    %v415 = vadd.f32 %v372, %v414
    %416 = vdwg.mxu0
    %v417 = vmax.f32 %v409, 0.0
    %v418 = vmax.f32 %v411, 0.0
    %v419 = vmax.f32 %v413, 0.0
    %v420 = vmax.f32 %v415, 0.0
    %v421 = vpack.c.bf16 %v419, %v417
    %v422 = vpack.c.bf16 %v420, %v418
    %v423 = vld [vmem:[%s3] sm:$0xff]
    %v424 = vld [vmem:[%s3 + $0x8] sm:$0xf]
    %v425 = vld [vmem:[%s3 + $0xc] sm:$0xff]
    %v426 = vld [vmem:[%s3 + $0x14] sm:$0xf]
    %v427 = vld [vmem:[%s3 + $0x18] sm:$0xff]
    %v428 = vld [vmem:[%s3 + $0x20] sm:$0xf]
    %v429 = vld [vmem:[%s3 + $0x24] sm:$0xff]
    %v430 = vld [vmem:[%s3 + $0x2c] sm:$0xf]
    %v431 = vld [vmem:[%s3 + $0x30] sm:$0xff]
    %v432 = vld [vmem:[%s3 + $0x38] sm:$0xf]
    %v433 = vld [vmem:[%s3 + $0x3c] sm:$0xff]
    %v434 = vld [vmem:[%s3 + $0x44] sm:$0xf]
    %v435 = vld [vmem:[%s3 + $0x48] sm:$0xff]
    %v436 = vld [vmem:[%s3 + $0x50] sm:$0xf]
    %v437 = vld [vmem:[%s3 + $0x54] sm:$0xff]
    %v438 = vld [vmem:[%s3 + $0x5c] sm:$0xf]
    %v439 = vld [vmem:[%s3 + $0x60] sm:$0xff]
    %v440 = vld [vmem:[%s3 + $0x68] sm:$0xf]
    %v441 = vld [vmem:[%s3 + $0x6c] sm:$0xff]
    %v442 = vld [vmem:[%s3 + $0x74] sm:$0xf]
    %v443 = vld [vmem:[%s3 + $0x78] sm:$0xff]
    %v444 = vld [vmem:[%s3 + $0x80] sm:$0xf]
    %v445 = vld [vmem:[%s3 + $0x84] sm:$0xff]
    %v446 = vld [vmem:[%s3 + $0x8c] sm:$0xf]
    %v447 = vld [vmem:[%s3 + $0x90] sm:$0xff]
    %v448 = vld [vmem:[%s3 + $0x98] sm:$0xf]
    %v449 = vld [vmem:[%s3 + $0x9c] sm:$0xff]
    %v450 = vld [vmem:[%s3 + $0xa4] sm:$0xf]
    %v451 = vld [vmem:[%s3 + $0xa8] sm:$0xff]
    %v452 = vld [vmem:[%s3 + $0xb0] sm:$0xf]
    %v453 = vld [vmem:[%s3 + $0xb4] sm:$0xff]
    %v454 = vld [vmem:[%s3 + $0xbc] sm:$0xf]
    %v455 = vld [vmem:[%s3 + $0xc0] sm:$0xff]
    %v456 = vld [vmem:[%s3 + $0xc8] sm:$0xf]
    %v457 = vld [vmem:[%s3 + $0xcc] sm:$0xff]
    %v458 = vld [vmem:[%s3 + $0xd4] sm:$0xf]
    %v459 = vld [vmem:[%s3 + $0xd8] sm:$0xff]
    %v460 = vld [vmem:[%s3 + $0xe0] sm:$0xf]
    %v461 = vld [vmem:[%s3 + $0xe4] sm:$0xff]
    %v462 = vld [vmem:[%s3 + $0xec] sm:$0xf]
    %v463 = vld [vmem:[%s3 + $0xf0] sm:$0xff]
    %v464 = vld [vmem:[%s3 + $0xf8] sm:$0xf]
    %v465 = vld [vmem:[%s3 + $0xfc] sm:$0xff]
    %v466 = vld [vmem:[%s3 + $0x104] sm:$0xf]
    %v467 = vld [vmem:[%s3 + $0x108] sm:$0xff]
    %v468 = vld [vmem:[%s3 + $0x110] sm:$0xf]
    %v469 = vld [vmem:[%s3 + $0x114] sm:$0xff]
    %v470 = vld [vmem:[%s3 + $0x11c] sm:$0xf]
    %v471 = vld [vmem:[%s3 + $0x120] sm:$0xff]
    %v472 = vld [vmem:[%s3 + $0x128] sm:$0xf]
    %v473 = vld [vmem:[%s3 + $0x12c] sm:$0xff]
    %v474 = vld [vmem:[%s3 + $0x134] sm:$0xf]
    %v475 = vld [vmem:[%s3 + $0x138] sm:$0xff]
    %v476 = vld [vmem:[%s3 + $0x140] sm:$0xf]
    %v477 = vld [vmem:[%s3 + $0x144] sm:$0xff]
    %v478 = vld [vmem:[%s3 + $0x14c] sm:$0xf]
    %v479 = vld [vmem:[%s3 + $0x150] sm:$0xff]
    %v480 = vld [vmem:[%s3 + $0x158] sm:$0xf]
    %v481 = vld [vmem:[%s3 + $0x15c] sm:$0xff]
    %v482 = vld [vmem:[%s3 + $0x164] sm:$0xf]
    %v483 = vld [vmem:[%s3 + $0x168] sm:$0xff]
    %v484 = vld [vmem:[%s3 + $0x170] sm:$0xf]
    %v485 = vld [vmem:[%s3 + $0x174] sm:$0xff]
    %v486 = vld [vmem:[%s3 + $0x17c] sm:$0xf]
    %v487 = vld [vmem:[%s4] sm:$0x7]
    %v489 = vlaneseq
    %v490 = vshrl.u32 %v489, 7
    %v491 = vsub.s32 0, %v490
    %v492 = vrot.slane %v487, %v491
    %v493 = vlaneseq
    %v494 = vshrl.u32 %v493, 7
    %v495 = vsub.s32 1, %v494
    %v496 = vrot.slane %v487, %v495
    %v497 = vlaneseq
    %v498 = vshrl.u32 %v497, 7
    %v499 = vsub.s32 2, %v498
    %v500 = vrot.slane %v487, %v499
    %v568 = vunpack.c.l.b16 %v423
    %v569 = vunpack.c.h.b16 %v423
    %v570 = vunpack.c.l.b16 %v424
    %v571 = vunpack.c.l.b16 %v425
    %v572 = vunpack.c.h.b16 %v425
    %v573 = vunpack.c.l.b16 %v426
    %v574 = vunpack.c.l.b16 %v427
    %v575 = vunpack.c.h.b16 %v427
    %v576 = vunpack.c.l.b16 %v428
    %v577 = vunpack.c.l.b16 %v429
    %v578 = vunpack.c.h.b16 %v429
    %v579 = vunpack.c.l.b16 %v430
    %v580 = vunpack.c.l.b16 %v431
    %v581 = vunpack.c.h.b16 %v431
    %v582 = vunpack.c.l.b16 %v432
    %v583 = vunpack.c.l.b16 %v433
    %v584 = vunpack.c.h.b16 %v433
    %v585 = vunpack.c.l.b16 %v434
    %v586 = vunpack.c.l.b16 %v435
    %v587 = vunpack.c.h.b16 %v435
    %v588 = vunpack.c.l.b16 %v436
    %v589 = vunpack.c.l.b16 %v437
    %v590 = vunpack.c.h.b16 %v437
    %v591 = vunpack.c.l.b16 %v438
    %v592 = vunpack.c.l.b16 %v439
    %v593 = vunpack.c.h.b16 %v439
    %v594 = vunpack.c.l.b16 %v440
    %v595 = vunpack.c.l.b16 %v441
    %v596 = vunpack.c.h.b16 %v441
    %v597 = vunpack.c.l.b16 %v442
    %v598 = vunpack.c.l.b16 %v443
    %v599 = vunpack.c.h.b16 %v443
    %v600 = vunpack.c.l.b16 %v444
    %v601 = vunpack.c.l.b16 %v445
    %v602 = vunpack.c.h.b16 %v445
    %v603 = vunpack.c.l.b16 %v446
    %v604 = vunpack.c.l.b16 %v447
    %v605 = vunpack.c.h.b16 %v447
    %v606 = vunpack.c.l.b16 %v448
    %v607 = vunpack.c.l.b16 %v449
    %v608 = vunpack.c.h.b16 %v449
    %v609 = vunpack.c.l.b16 %v450
    %v610 = vunpack.c.l.b16 %v451
    %v611 = vunpack.c.h.b16 %v451
    %v612 = vunpack.c.l.b16 %v452
    %v613 = vunpack.c.l.b16 %v453
    %v614 = vunpack.c.h.b16 %v453
    %v615 = vunpack.c.l.b16 %v454
    %v616 = vunpack.c.l.b16 %v455
    %v617 = vunpack.c.h.b16 %v455
    %v618 = vunpack.c.l.b16 %v456
    %v619 = vunpack.c.l.b16 %v457
    %v620 = vunpack.c.h.b16 %v457
    %v621 = vunpack.c.l.b16 %v458
    %v622 = vunpack.c.l.b16 %v459
    %v623 = vunpack.c.h.b16 %v459
    %v624 = vunpack.c.l.b16 %v460
    %v625 = vunpack.c.l.b16 %v461
    %v626 = vunpack.c.h.b16 %v461
    %v627 = vunpack.c.l.b16 %v462
    %v628 = vunpack.c.l.b16 %v463
    %v629 = vunpack.c.h.b16 %v463
    %v630 = vunpack.c.l.b16 %v464
    %v631 = vunpack.c.l.b16 %v465
    %v632 = vunpack.c.h.b16 %v465
    %v633 = vunpack.c.l.b16 %v466
    %v634 = vunpack.c.l.b16 %v467
    %v635 = vunpack.c.h.b16 %v467
    %v636 = vunpack.c.l.b16 %v468
    %v637 = vunpack.c.l.b16 %v469
    %v638 = vunpack.c.h.b16 %v469
    %v639 = vunpack.c.l.b16 %v470
    %v640 = vunpack.c.l.b16 %v471
    %v641 = vunpack.c.h.b16 %v471
    %v642 = vunpack.c.l.b16 %v472
    %v643 = vunpack.c.l.b16 %v473
    %v644 = vunpack.c.h.b16 %v473
    %v645 = vunpack.c.l.b16 %v474
    %v646 = vunpack.c.l.b16 %v475
    %v647 = vunpack.c.h.b16 %v475
    %v648 = vunpack.c.l.b16 %v476
    %v649 = vunpack.c.l.b16 %v477
    %v650 = vunpack.c.h.b16 %v477
    %v651 = vunpack.c.l.b16 %v478
    %v652 = vunpack.c.l.b16 %v479
    %v653 = vunpack.c.h.b16 %v479
    %v654 = vunpack.c.l.b16 %v480
    %v655 = vunpack.c.l.b16 %v481
    %v656 = vunpack.c.h.b16 %v481
    %v657 = vunpack.c.l.b16 %v482
    %v658 = vunpack.c.l.b16 %v483
    %v659 = vunpack.c.h.b16 %v483
    %v660 = vunpack.c.l.b16 %v484
    %v661 = vunpack.c.l.b16 %v485
    %v662 = vunpack.c.h.b16 %v485
    %v663 = vunpack.c.l.b16 %v486
    %v664 = vpack.c.b16 %v571, %v568
    %v665 = vpack.c.b16 %v572, %v569
    %v666 = vpack.c.b16 %v573, %v570
    %v667 = vpack.c.b16 %v577, %v574
    %v668 = vpack.c.b16 %v578, %v575
    %v669 = vpack.c.b16 %v579, %v576
    %v670 = vpack.c.b16 %v583, %v580
    %v671 = vpack.c.b16 %v584, %v581
    %v672 = vpack.c.b16 %v585, %v582
    %v673 = vpack.c.b16 %v589, %v586
    %v674 = vpack.c.b16 %v590, %v587
    %v675 = vpack.c.b16 %v591, %v588
    %v676 = vpack.c.b16 %v595, %v592
    %v677 = vpack.c.b16 %v596, %v593
    %v678 = vpack.c.b16 %v597, %v594
    %v679 = vpack.c.b16 %v601, %v598
    %v680 = vpack.c.b16 %v602, %v599
    %v681 = vpack.c.b16 %v603, %v600
    %v682 = vpack.c.b16 %v607, %v604
    %v683 = vpack.c.b16 %v608, %v605
    %v684 = vpack.c.b16 %v609, %v606
    %v685 = vpack.c.b16 %v613, %v610
    %v686 = vpack.c.b16 %v614, %v611
    %v687 = vpack.c.b16 %v615, %v612
    %v688 = vpack.c.b16 %v619, %v616
    %v689 = vpack.c.b16 %v620, %v617
    %v690 = vpack.c.b16 %v621, %v618
    %v691 = vpack.c.b16 %v625, %v622
    %v692 = vpack.c.b16 %v626, %v623
    %v693 = vpack.c.b16 %v627, %v624
    %v694 = vpack.c.b16 %v631, %v628
    %v695 = vpack.c.b16 %v632, %v629
    %v696 = vpack.c.b16 %v633, %v630
    %v697 = vpack.c.b16 %v637, %v634
    %v698 = vpack.c.b16 %v638, %v635
    %v699 = vpack.c.b16 %v639, %v636
    %v700 = vpack.c.b16 %v643, %v640
    %v701 = vpack.c.b16 %v644, %v641
    %v702 = vpack.c.b16 %v645, %v642
    %v703 = vpack.c.b16 %v649, %v646
    %v704 = vpack.c.b16 %v650, %v647
    %v705 = vpack.c.b16 %v651, %v648
    %v706 = vpack.c.b16 %v655, %v652
    %v707 = vpack.c.b16 %v656, %v653
    %v708 = vpack.c.b16 %v657, %v654
    %v709 = vpack.c.b16 %v661, %v658
    %v710 = vpack.c.b16 %v662, %v659
    %v711 = vpack.c.b16 %v663, %v660
    %760 = vmatprep.subr.bf16.mxu0 %v665
    %761 = vmatpush1.bf16.msra.mxu0 %v664
    %762 = vmatprep.subr.bf16.mxu0 %v668
    %763 = vmatpush1.bf16.msra.mxu0 %v667
    %764 = vmatprep.subr.bf16.mxu0 %v671
    %765 = vmatpush1.bf16.msra.mxu0 %v670
    %766 = vmatprep.subr.bf16.mxu0 %v674
    %767 = vmatpush1.bf16.msra.mxu0 %v673
    %768 = vmatprep.subr.bf16.mxu0 %v677
    %769 = vmatpush1.bf16.msra.mxu0 %v676
    %770 = vmatprep.subr.bf16.mxu0 %v680
    %771 = vmatpush1.bf16.msra.mxu0 %v679
    %772 = vmatprep.subr.bf16.mxu0 %v683
    %773 = vmatpush1.bf16.msra.mxu0 %v682
    %774 = vmatprep.subr.bf16.mxu0 %v686
    %775 = vmatpush1.bf16.msra.mxu0 %v685
    %776 = vmatprep.subr.bf16.mxu0 %v689
    %777 = vmatpush1.bf16.msra.mxu0 %v688
    %778 = vmatprep.subr.bf16.mxu0 %v692
    %779 = vmatpush1.bf16.msra.mxu0 %v691
    %780 = vmatprep.subr.bf16.mxu0 %v695
    %781 = vmatpush1.bf16.msra.mxu0 %v694
    %782 = vmatprep.subr.bf16.mxu0 %v698
    %783 = vmatpush1.bf16.msra.mxu0 %v697
    %784 = vmatprep.subr.bf16.mxu0 %v701
    %785 = vmatpush1.bf16.msra.mxu0 %v700
    %786 = vmatprep.subr.bf16.mxu0 %v704
    %787 = vmatpush1.bf16.msra.mxu0 %v703
    %788 = vmatprep.subr.bf16.mxu0 %v707
    %789 = vmatpush1.bf16.msra.mxu0 %v706
    %790 = vmatprep.subr.bf16.mxu0 %v710
    %791 = vmatpush1.bf16.msra.mxu0 %v709
    %792 = vmatprep.mubr.bf16.mxu0 %v422
    %793 = vmatmul.mubr.bf16.gmra.mrb[0].mxu0 %v421
    %v794 = vpop.f32.mrb[0].mxu0
    %v795 = vadd.f32 %v492, %v794
    %v796 = vpop.f32.mrb[0].mxu0
    %v797 = vadd.f32 %v496, %v796
    %v798 = vpop.f32.mrb[0].mxu0
    %v799 = vadd.f32 %v492, %v798
    %v800 = vpop.f32.mrb[0].mxu0
    %v801 = vadd.f32 %v496, %v800
    %802 = vdwg.mxu0
    %803 = vmatprep.subr.bf16.mxu0 0
    %804 = vmatpush1.bf16.msra.mxu0 %v666
    %805 = vmatprep.subr.bf16.mxu0 0
    %806 = vmatpush1.bf16.msra.mxu0 %v669
    %807 = vmatprep.subr.bf16.mxu0 0
    %808 = vmatpush1.bf16.msra.mxu0 %v672
    %809 = vmatprep.subr.bf16.mxu0 0
    %810 = vmatpush1.bf16.msra.mxu0 %v675
    %811 = vmatprep.subr.bf16.mxu0 0
    %812 = vmatpush1.bf16.msra.mxu0 %v678
    %813 = vmatprep.subr.bf16.mxu0 0
    %814 = vmatpush1.bf16.msra.mxu0 %v681
    %815 = vmatprep.subr.bf16.mxu0 0
    %816 = vmatpush1.bf16.msra.mxu0 %v684
    %817 = vmatprep.subr.bf16.mxu0 0
    %818 = vmatpush1.bf16.msra.mxu0 %v687
    %819 = vmatprep.subr.bf16.mxu0 0
    %820 = vmatpush1.bf16.msra.mxu0 %v690
    %821 = vmatprep.subr.bf16.mxu0 0
    %822 = vmatpush1.bf16.msra.mxu0 %v693
    %823 = vmatprep.subr.bf16.mxu0 0
    %824 = vmatpush1.bf16.msra.mxu0 %v696
    %825 = vmatprep.subr.bf16.mxu0 0
    %826 = vmatpush1.bf16.msra.mxu0 %v699
    %827 = vmatprep.subr.bf16.mxu0 0
    %828 = vmatpush1.bf16.msra.mxu0 %v702
    %829 = vmatprep.subr.bf16.mxu0 0
    %830 = vmatpush1.bf16.msra.mxu0 %v705
    %831 = vmatprep.subr.bf16.mxu0 0
    %832 = vmatpush1.bf16.msra.mxu0 %v708
    %833 = vmatprep.subr.bf16.mxu0 0
    %834 = vmatpush1.bf16.msra.mxu0 %v711
    %835 = vmatprep.mubr.bf16.mxu0 %v422
    %836 = vmatmul.mubr.bf16.gmra.mrb[0].mxu0 %v421
    %v837 = vpop.f32.mrb[0].mxu0
    %v838 = vadd.f32 %v500, %v837
    %v839 = vpop.f32.mrb[0].mxu0
    %v840 = vpop.f32.mrb[0].mxu0
    %v841 = vadd.f32 %v500, %v840
    %v842 = vpop.f32.mrb[0].mxu0
    %843 = vdwg.mxu0
    %v844 = vtanh.pop %v795
    %v845 = vtanh.pop %v797
    %v846 = vtanh.pop %v838
    %v847 = vtanh.pop %v799
    %v848 = vtanh.pop %v801
    %v849 = vtanh.pop %v841
    %850 = vst [vmem:[#allocation2] sm:$0xff] %v844
    %851 = vst [vmem:[#allocation2 + $0x8] sm:$0xff] %v845
    %852 = vst [vmem:[#allocation2 + $0x10] sm:$0xff] %v846
    %853 = vst [vmem:[#allocation2 + $0x18] sm:$0xff] %v847
    %854 = vst [vmem:[#allocation2 + $0x20] sm:$0xff] %v848
    %855 = vst [vmem:[#allocation2 + $0x28] sm:$0xff] %v849
    // Predicated region
    $region22: #{autoencoder_forward.1} parent=1 // pred_check
      _
    $region23: #{autoencoder_forward.1} parent=1 // pred_check_branch
      %857 = sbr.rel (0) target = $region25
    $region24: #{autoencoder_forward.1} parent=1 // pred_region
      %s859 = ssub.s32 768, 384
      %860 = vsyncadd [#allocation3], %s859
      %s861 = sshll.u32 [#allocation2], 4
      %s862 = int_to_ptr.vmem [resolvable:$true] %s861
      %867 = dma.vmem_to_hbm [thread:$0]  %s862, 384, %s5, [#allocation3], 384, 384, 24
    $region25: #{autoencoder_forward.1} parent=1 // pred_fallthru
      _
    // Predicated region
    $region26: #{autoencoder_forward.1} parent=1 // pred_check
      _
    $region27: #{autoencoder_forward.1} parent=1 // pred_check_branch
      %869 = sbr.rel (0) target = $region29
    $region28: #{autoencoder_forward.1} parent=1 // pred_region
      %870 = dma.done [#allocation3], 768
    $region29: #{autoencoder_forward.1} parent=1 // pred_fallthru
      _
    %871 = vsyncpa [#allocation3], 1

</llo_original>
